<compile_context>
chip_gen: v5e
topology: v5e:2x2
jax: 0.10.0
libtpu: 0.0.40
codegen_flags: <defaults>
</compile_context>

<pallas_src>
import jax
import jax.numpy as jnp
from jax.experimental import pallas as pl
from jax.experimental.pallas import tpu as pltpu


def _ceil_div(a: int, b: int) -> int:
    return -(-a // b)


def _make_var_partial_kernel(rows_total, block_rows, blocks_per_split, needs_mask):
    groups = block_rows // 8

    def kernel(x_ref, sum_ref, sumsq_ref):
        i = pl.program_id(0)   # core-split axis ("parallel")
        j = pl.program_id(1)   # reduction axis  ("arbitrary")

        @pl.when(j == 0)
        def _init():
            sum_ref[...] = jnp.zeros_like(sum_ref)
            sumsq_ref[...] = jnp.zeros_like(sumsq_ref)

        x = x_ref[...]                                     # (block_rows, D) f32
        if needs_mask:
            # Zero rows past the end of the array (remainder of the last block
            # and fully-padded blocks of the core split). Exact for sum/sumsq.
            gb = i * blocks_per_split + j                  # global block index
            row = jax.lax.broadcasted_iota(jnp.int32, (block_rows, 1), 0)
            x = jnp.where(gb * block_rows + row < rows_total, x, 0.0)

        # Reduce the block to an (8, D) sublane/lane-dense partial with pure
        # vreg-wise VPU adds (sublane-tile-aligned reshape: layout no-op).
        xg = x.reshape(groups, 8, x.shape[1])
        sum_ref[...] += jnp.sum(xg, axis=0)
        sumsq_ref[...] += jnp.sum(xg * xg, axis=0)

    return kernel


def var_dim_keepdim_false(x, *, target_block_bytes=4 * 1024 * 1024):
    """Unbiased (correction=1) variance over all elements of a 3-D tensor."""
    x = jnp.asarray(x, jnp.float32)
    assert x.ndim == 3, "module is annotated for a rank-3 float32 tensor"
    B, S, D = x.shape
    n_total = B * S * D

    # KB-scale inputs: pallas_call launch / pipeline prologue dominates and
    # XLA's fused reduction is already optimal — skip the kernel.
    if n_total < 1024:
        return jnp.var(x, ddof=1)

    rows = B * S
    x2 = x.reshape(rows, D)                     # contiguous -> free reshape

    # Row-block sized to ~target_block_bytes (multiple of 8 rows); with the
    # default 4 MiB target, 2x (double buffering) = 8 MiB fits every
    # generation's scoped-VMEM default (16 MiB v5e, 32 MiB v6e/v7x).
    bytes_per_row_group = 8 * D * 4
    groups_per_block = max(1, target_block_bytes // bytes_per_row_group)
    block_rows = min(groups_per_block * 8, _ceil_div(rows, 8) * 8)
    num_blocks = _ceil_div(rows, block_rows)

    # Split the reduction across a leading "parallel" axis so v7x's two
    # TensorCores each own half the blocks (pure serial loop on v5e/v6e).
    num_splits = 2 if num_blocks >= 2 else 1
    blocks_per_split = _ceil_div(num_blocks, num_splits)
    covered_rows = num_splits * blocks_per_split * block_rows
    needs_mask = covered_rows != rows

    kernel = _make_var_partial_kernel(rows, block_rows, blocks_per_split, needs_mask)

    def x_index_map(i, j):
        gb = i * blocks_per_split + j
        # Clamp padded tail blocks in-bounds; their contribution is masked to 0.
        return (jnp.minimum(gb, num_blocks - 1), 0)

    partial_shape = jax.ShapeDtypeStruct((num_splits * 8, D), jnp.float32)
    out_spec = pl.BlockSpec((8, D), lambda i, j: (i, 0))

    sum_part, sumsq_part = pl.pallas_call(
        kernel,
        out_shape=(partial_shape, partial_shape),
        grid_spec=pltpu.PrefetchScalarGridSpec(
            num_scalar_prefetch=0,
            grid=(num_splits, blocks_per_split),
            in_specs=[pl.BlockSpec((block_rows, D), x_index_map)],
            out_specs=[out_spec, out_spec],
        ),
        compiler_params=pltpu.CompilerParams(
            dimension_semantics=("parallel", "arbitrary"),
        ),
    )(x2)

    # Tiny final combine in plain JAX.
    s = jnp.sum(sum_part)
    ss = jnp.sum(sumsq_part)
    n = jnp.float32(n_total)
    # NOTE: the one-pass (sum, sumsq) formula can lose precision in f32 when
    # |mean| >> std; the lane-dense tree partials above mitigate this. A
    # Welford-style per-block (n, mean, M2) combine would be fully robust.
    return (ss - s * s / n) / jnp.float32(n_total - 1)


if __name__ == "__main__":
    key = jax.random.PRNGKey(0)
    k1, k2 = jax.random.split(key)

    # Case 1: small shape consistent with the module's [-1, -1, -1] annotation;
    # single large block, no masking.
    x1 = jax.random.normal(k1, (2, 8, 128), dtype=jnp.float32)
    out1 = jax.block_until_ready(var_dim_keepdim_false(x1))
    ref1 = jnp.var(x1, ddof=1)
    assert jnp.allclose(out1, ref1, rtol=2e-4, atol=1e-5), (out1, ref1)

    # Case 2: awkward (non-multiple-of-8/128) dims with a small block target to
    # exercise the multi-block grid, the core-split axis, remainder masking and
    # tail-block index clamping.
    x2 = jax.random.normal(k2, (6, 40, 136), dtype=jnp.float32) * 1.7 + 0.3
    out2 = jax.block_until_ready(
        var_dim_keepdim_false(x2, target_block_bytes=32 * 1024)
    )
    ref2 = jnp.var(x2, ddof=1)
    assert jnp.allclose(out2, ref2, rtol=2e-4, atol=1e-5), (out2, ref2)

    print("KERNEL_OK")
</pallas_src>

<mosaic_0001>
module attributes {stable_mosaic.version = 11 : i64} {
  func.func @kernel(%arg0: i32, %arg1: i32, %arg2: memref<16x128xf32, #tpu.memory_space<vmem>>, %arg3: memref<8x128xf32, #tpu.memory_space<vmem>>, %arg4: memref<8x128xf32, #tpu.memory_space<vmem>>) attributes {dimension_semantics = [#tpu.dimension_semantics<parallel>, #tpu.dimension_semantics<arbitrary>], iteration_bounds = array<i64: 1, 1>, scalar_prefetch = 0 : i64, scratch_operands = 0 : i64, tpu.core_type = #tpu.core_type<tc>, window_params = [{transform_indices = @transform_0, window_bounds = array<i64: 16, 128>}, {transform_indices = @transform_1, window_bounds = array<i64: 8, 128>}, {transform_indices = @transform_2, window_bounds = array<i64: 8, 128>}]} {
    %c0_i32 = arith.constant 0 : i32
    %0 = arith.cmpi eq, %arg1, %c0_i32 : i32
    %1 = arith.extui %0 : i1 to i32
    %c0_i32_0 = arith.constant 0 : i32
    %2 = arith.cmpi ne, %1, %c0_i32_0 : i32
    scf.if %2 {
      %cst_11 = arith.constant 0.000000e+00 : f32
      %14 = vector.broadcast %cst_11 : f32 to vector<8x128xf32>
      %c0_12 = arith.constant 0 : index
      %c0_13 = arith.constant 0 : index
      %15 = vector.load %arg3[%c0_12, %c0_13] : memref<8x128xf32, #tpu.memory_space<vmem>>, vector<8x128xf32>
      tpu.vector_store %arg3[%c0_12, %c0_13], %14 {strides = array<i32>} : memref<8x128xf32, #tpu.memory_space<vmem>>, vector<8x128xf32>,
      %cst_14 = arith.constant 0.000000e+00 : f32
      %16 = vector.broadcast %cst_14 : f32 to vector<8x128xf32>
      %c0_15 = arith.constant 0 : index
      %c0_16 = arith.constant 0 : index
      %17 = vector.load %arg4[%c0_15, %c0_16] : memref<8x128xf32, #tpu.memory_space<vmem>>, vector<8x128xf32>
      tpu.vector_store %arg4[%c0_15, %c0_16], %16 {strides = array<i32>} : memref<8x128xf32, #tpu.memory_space<vmem>>, vector<8x128xf32>,
    } else {
    }
    %c0 = arith.constant 0 : index
    %c0_1 = arith.constant 0 : index
    %3 = vector.load %arg2[%c0, %c0_1] : memref<16x128xf32, #tpu.memory_space<vmem>>, vector<16x128xf32>
    %4 = vector.shape_cast %3 : vector<16x128xf32> to vector<2x8x128xf32>
    %c0_2 = arith.constant 0 : index
    %c0_3 = arith.constant 0 : index
    %5 = vector.load %arg3[%c0_2, %c0_3] : memref<8x128xf32, #tpu.memory_space<vmem>>, vector<8x128xf32>
    %cst = arith.constant dense<0.000000e+00> : vector<8x128xf32>
    %6 = vector.multi_reduction <add>, %4, %cst [0] : vector<2x8x128xf32> to vector<8x128xf32>
    %7 = arith.addf %5, %6 : vector<8x128xf32>
    %c0_4 = arith.constant 0 : index
    %c0_5 = arith.constant 0 : index
    %8 = vector.load %arg3[%c0_4, %c0_5] : memref<8x128xf32, #tpu.memory_space<vmem>>, vector<8x128xf32>
    tpu.vector_store %arg3[%c0_4, %c0_5], %7 {strides = array<i32>} : memref<8x128xf32, #tpu.memory_space<vmem>>, vector<8x128xf32>,
    %c0_6 = arith.constant 0 : index
    %c0_7 = arith.constant 0 : index
    %9 = vector.load %arg4[%c0_6, %c0_7] : memref<8x128xf32, #tpu.memory_space<vmem>>, vector<8x128xf32>
    %10 = arith.mulf %4, %4 : vector<2x8x128xf32>
    %cst_8 = arith.constant dense<0.000000e+00> : vector<8x128xf32>
    %11 = vector.multi_reduction <add>, %10, %cst_8 [0] : vector<2x8x128xf32> to vector<8x128xf32>
    %12 = arith.addf %9, %11 : vector<8x128xf32>
    %c0_9 = arith.constant 0 : index
    %c0_10 = arith.constant 0 : index
    %13 = vector.load %arg4[%c0_9, %c0_10] : memref<8x128xf32, #tpu.memory_space<vmem>>, vector<8x128xf32>
    tpu.vector_store %arg4[%c0_9, %c0_10], %12 {strides = array<i32>} : memref<8x128xf32, #tpu.memory_space<vmem>>, vector<8x128xf32>,
    return
  }
  func.func @transform_0(%arg0: i32, %arg1: i32) -> (i32, i32) {
    %c1_i32 = arith.constant 1 : i32
    %0 = arith.muli %arg0, %c1_i32 : i32
    %1 = arith.addi %0, %arg1 : i32
    %c0_i32 = arith.constant 0 : i32
    %2 = arith.minsi %1, %c0_i32 : i32
    %c0_i32_0 = arith.constant 0 : i32
    %c0_i32_1 = arith.constant 0 : i32
    return %2, %c0_i32_0 : i32, i32
  }
  func.func @transform_1(%arg0: i32, %arg1: i32) -> (i32, i32) {
    %c0_i32 = arith.constant 0 : i32
    %c0_i32_0 = arith.constant 0 : i32
    return %arg0, %c0_i32 : i32, i32
  }
  func.func @transform_2(%arg0: i32, %arg1: i32) -> (i32, i32) {
    %c0_i32 = arith.constant 0 : i32
    %c0_i32_0 = arith.constant 0 : i32
    return %arg0, %c0_i32 : i32, i32
  }
}

</mosaic_0001>

<llo_original>
// kernel: tpu_custom_call.1
$region0: #{tpu_custom_call.1}
  #allocation0 [shape = 'u32[]', space=smem, size = 0x4, offset = 0x4, fixed_abs, tag = 'smem constant byte address 0x4 - core index']
  #allocation1 [shape = 'u32[72,128]{1,0:T(1,128)}', space=vmem, size = 0x9000, scoped, tag = 'internal scratch']
  %s0 = inlined_call_operand.hbm [shape: f32[16,128], index: 0, kind: input, shape index: {}]
  %s1 = inlined_call_operand.hbm [shape: f32[8,128], index: 1, kind: output, shape index: {0}]
  %s2 = inlined_call_operand.hbm [shape: f32[8,128], index: 2, kind: output, shape index: {1}]
  %3 = xla_tuple %s1, %s2
  %s4 = sld [smem:[#allocation0]]
  $region30: #{tpu_custom_call.1} parent=0
    _
  %s6 = ssub.s32 1, %s4
  %s7 = scalar_select 0, %s6, %s4
  $region1: #{tpu_custom_call.1} parent=0
    #allocation2 [shape = 'u8[8192]{0}', space=vmem, size = 0x2000, scoped, tag = 'input window, operand 0, single buffered']
    #allocation3 [shape = 's32[1]{0}', space=sflag, size = 0x4, scoped, tag = 'scoped memory for tpu_custom_call.1']
    #allocation4 [shape = 's32[1]{0}', space=sflag, size = 0x4, scoped, tag = 'scoped memory for tpu_custom_call.1']
    #allocation5 [shape = 'u8[4096]{0}', space=vmem, size = 0x1000, scoped, tag = 'output window, operand 0, single buffered']
    #allocation6 [shape = 'u8[4096]{0}', space=vmem, size = 0x1000, scoped, tag = 'output window, operand 1, single buffered']
    #allocation7 [shape = 's32[1]{0}', space=sflag, size = 0x4, scoped, tag = 'scoped memory for tpu_custom_call.1']
    %8 = vsyncpa [#allocation3], 0
    %9 = vsyncpa [#allocation4], 0
    %10 = vsyncpa [#allocation7], 0
    // Predicated region
    $region2: #{tpu_custom_call.1} parent=1 // pred_check
      _
    $region3: #{tpu_custom_call.1} parent=1 // pred_check_branch
      %12 = sbr.rel (0) target = $region5
    $region4: #{tpu_custom_call.1} parent=1 // pred_region
      %s13 = sadd.s32 0, 0
      %p14 = scmp.lt.s32.totalorder %s13, 0
      %s15 = scalar_select %p14, %s13, 0
      %s16 = smul.u32 2, %s15
      %18 = vsyncadd [#allocation3], 0
      %s19 = smul.addr %s16, 8
      %s20 = scalar_lea.hbm %s0, %s19
      %s21 = sshll.u32 %s20, 4
      %s22 = int_to_ptr.hbm [resolvable:$true] %s21
      %s23 = sshll.u32 [#allocation2], 4
      %s24 = int_to_ptr.vmem [resolvable:$true] %s23
      %29 = dma.hbm_to_vmem [thread:$0]  %s22, 256, %s24, [#allocation3], 128, 128, 8
    $region5: #{tpu_custom_call.1} parent=1 // pred_fallthru
      _
    // Predicated region
    $region6: #{tpu_custom_call.1} parent=1 // pred_check
      _
    $region7: #{tpu_custom_call.1} parent=1 // pred_check_branch
      %31 = sbr.rel (0) target = $region9
    $region8: #{tpu_custom_call.1} parent=1 // pred_region
      %33 = dma.done [#allocation3], 256
    $region9: #{tpu_custom_call.1} parent=1 // pred_fallthru
      _
    %s34 = sadd.s32 0, 0
    %p35 = scmp.lt.s32.totalorder %s34, 0
    %s36 = scalar_select %p35, %s34, 0
    %s37 = smul.u32 2, %s36
    %p38 = scmp.eq.s32.totalorder 0, 0
    // Predicated region
    $region10: #{tpu_custom_call.1} parent=1 // pred_check
      %p39 = pneg %p38
    $region11: #{tpu_custom_call.1} parent=1 // pred_check_branch
      %41 = sbr.rel (%p39) target = $region13
    $region12: #{tpu_custom_call.1} parent=1 // pred_region
      %42 = vst [vmem:[#allocation5] sm:$0xff] 0.0
      %43 = vst [vmem:[#allocation6] sm:$0xff] 0.0
    $region13: #{tpu_custom_call.1} parent=1 // pred_fallthru
      _
    %v44 = vld [vmem:[#allocation2] sm:$0xff]
    %v45 = vld [vmem:[#allocation2 + $0x8] sm:$0xff]
    %v46 = vld [vmem:[#allocation5] sm:$0xff]
    %v47 = vadd.f32 %v44, %v45
    %v48 = vadd.f32 %v46, %v47
    %49 = vst [vmem:[#allocation5] sm:$0xff] %v48
    %v50 = vld [vmem:[#allocation6] sm:$0xff]
    %v51 = vmul.f32 %v44, %v44
    %v52 = vmul.f32 %v45, %v45
    %v53 = vadd.f32 %v51, %v52
    %v54 = vadd.f32 %v50, %v53
    %55 = vst [vmem:[#allocation6] sm:$0xff] %v54
    // Predicated region
    $region14: #{tpu_custom_call.1} parent=1 // pred_check
      _
    $region15: #{tpu_custom_call.1} parent=1 // pred_check_branch
      %57 = sbr.rel (0) target = $region17
    $region16: #{tpu_custom_call.1} parent=1 // pred_region
      %59 = vsyncadd [#allocation4], 0
      %s61 = sshll.u32 [#allocation5], 4
      %s62 = int_to_ptr.vmem [resolvable:$true] %s61
      %s63 = sshll.u32 %s1, 4
      %s64 = int_to_ptr.hbm [resolvable:$true] %s63
      %66 = dma.vmem_to_hbm [thread:$0]  %s62, 128, %s64, [#allocation4]
    $region17: #{tpu_custom_call.1} parent=1 // pred_fallthru
      _
    // Predicated region
    $region18: #{tpu_custom_call.1} parent=1 // pred_check
      _
    $region19: #{tpu_custom_call.1} parent=1 // pred_check_branch
      %68 = sbr.rel (0) target = $region21
    $region20: #{tpu_custom_call.1} parent=1 // pred_region
      %70 = vsyncadd [#allocation7], 0
      %s72 = sshll.u32 [#allocation6], 4
      %s73 = int_to_ptr.vmem [resolvable:$true] %s72
      %s74 = sshll.u32 %s2, 4
      %s75 = int_to_ptr.hbm [resolvable:$true] %s74
      %77 = dma.vmem_to_hbm [thread:$0]  %s73, 128, %s75, [#allocation7]
    $region21: #{tpu_custom_call.1} parent=1 // pred_fallthru
      _
    // Predicated region
    $region22: #{tpu_custom_call.1} parent=1 // pred_check
      _
    $region23: #{tpu_custom_call.1} parent=1 // pred_check_branch
      %79 = sbr.rel (0) target = $region25
    $region24: #{tpu_custom_call.1} parent=1 // pred_region
      %81 = dma.done [#allocation4], 128
    $region25: #{tpu_custom_call.1} parent=1 // pred_fallthru
      _
    // Predicated region
    $region26: #{tpu_custom_call.1} parent=1 // pred_check
      _
    $region27: #{tpu_custom_call.1} parent=1 // pred_check_branch
      %83 = sbr.rel (0) target = $region29
    $region28: #{tpu_custom_call.1} parent=1 // pred_region
      %85 = dma.done [#allocation7], 128
    $region29: #{tpu_custom_call.1} parent=1 // pred_fallthru
      _
    %86 = vsyncpa [#allocation3], 1
    %87 = vsyncpa [#allocation4], 1
    %88 = vsyncpa [#allocation7], 1

</llo_original>
